<compile_context>
chip_gen: v6e
topology: v6e:2x2x1
jax: 0.10.0
libtpu: 0.0.40
codegen_flags: <defaults>
</compile_context>

<pallas_src>
import functools

import numpy as np

import jax
import jax.numpy as jnp
from jax.experimental import pallas as pl
from jax.experimental.pallas import tpu as pltpu

_LANE = 128
_MAX_BLOCK_ROWS = 8192   # 8192 x 128 x 4B = 4 MiB per f32 block per operand
_ROW_ALIGN = 512         # multiple of 32 -> legal sublane tiling for f32/bf16/int8


# ---------------------------------------------------------------------------
# Kernels (elementwise hot path)
# ---------------------------------------------------------------------------
def _clean_kernel(x_ref, o_ref):
    x = x_ref[...]
    # torch.where(|x| < 0.05, 0, x): NaN propagates (|NaN| < 0.05 is False).
    small = jnp.abs(x.astype(jnp.float32)) < jnp.float32(0.05)
    o_ref[...] = jnp.where(small, jnp.zeros_like(x), x)


def _threshold_kernel(thr_ref, x_ref, o_ref):
    thr = thr_ref[0]                       # f32 scalar read from SMEM (free)
    x = x_ref[...].astype(jnp.float32)
    # torch.where(x <= thr, 0, 1): NaN -> 1 (NaN <= thr is False).
    below = x <= thr
    o_ref[...] = jnp.logical_not(below).astype(o_ref.dtype)


# ---------------------------------------------------------------------------
# Plain-JAX reference paths (tail handling / fusion-friendly fast path)
# ---------------------------------------------------------------------------
def _clean_jnp(x):
    small = jnp.abs(x.astype(jnp.float32)) < jnp.float32(0.05)
    return jnp.where(small, jnp.zeros_like(x), x)


def _threshold_jnp(x, thr_f32, mask_dtype):
    below = x.astype(jnp.float32) <= thr_f32
    return jnp.logical_not(below).astype(mask_dtype)


# ---------------------------------------------------------------------------
# Wrapper / glue
# ---------------------------------------------------------------------------
def _pick_block_rows(rows):
    """Block row count: big blocks, but always >= 2 blocks for non-trivial inputs
    so v7x's two TensorCores both get work under the 'parallel' grid axis."""
    if rows <= _ROW_ALIGN:
        return rows                          # single full-extent block (legal)
    half = pl.cdiv(rows, 2)
    half = pl.cdiv(half, _ROW_ALIGN) * _ROW_ALIGN   # sublane-friendly multiple
    return min(_MAX_BLOCK_ROWS, half)


def _run_elementwise(kernel, x2d, out_dtype, extra_args=(), extra_specs=()):
    rows = x2d.shape[0]
    block_rows = _pick_block_rows(rows)
    grid = (pl.cdiv(rows, block_rows),)      # ragged last block is masked
    blk = pl.BlockSpec((block_rows, _LANE), lambda i: (i, 0))

    # Double-buffered in + out working set, plus headroom. Explicit limit keeps
    # the 4 MiB-block config portable (v5e default scoped limit is only 16 MiB).
    out_itemsize = np.dtype(out_dtype).itemsize
    vmem_bytes = 2 * block_rows * _LANE * (x2d.dtype.itemsize + out_itemsize)
    params = pltpu.CompilerParams(
        dimension_semantics=("parallel",),
        vmem_limit_bytes=min(vmem_bytes + (4 << 20), 48 << 20),
    )
    return pl.pallas_call(
        kernel,
        out_shape=jax.ShapeDtypeStruct((rows, _LANE), out_dtype),
        grid=grid,
        in_specs=list(extra_specs) + [blk],
        out_specs=blk,
        compiler_params=params,
    )(*extra_args, x2d)


@functools.partial(jax.jit, static_argnames=("task", "mask_dtype", "use_pallas"))
def ste_forward(x, task, threshold=None, mask_dtype=jnp.int8, use_pallas=True):
    """Forward pass of StraightThroughEstimator as a Pallas TPU kernel."""
    if task not in ("clean", "threshold"):
        raise ValueError(f"Unknown task {task}")
    if task == "threshold" and threshold is None:
        raise ValueError("threshold task requires a threshold value")

    if task == "clean":
        out_dtype = x.dtype
        thr_f32 = None
        jnp_fn = _clean_jnp
    else:
        out_dtype = mask_dtype
        thr_f32 = jnp.asarray(threshold, jnp.float32)
        jnp_fn = lambda t: _threshold_jnp(t, thr_f32, mask_dtype)

    if not use_pallas:
        # Fusion-friendly path for use inside larger jitted networks.
        return jnp_fn(x)

    flat = x.reshape(-1)
    n = flat.shape[0]
    n_aligned = (n // _LANE) * _LANE

    pieces = []
    if n_aligned:
        head = flat if n_aligned == n else flat[:n_aligned]
        x2d = head.reshape(-1, _LANE)
        if task == "clean":
            y2d = _run_elementwise(_clean_kernel, x2d, out_dtype)
        else:
            thr_arr = jnp.reshape(thr_f32, (1,))
            smem_spec = pl.BlockSpec(memory_space=pltpu.MemorySpace.SMEM)
            y2d = _run_elementwise(_threshold_kernel, x2d, out_dtype,
                                   extra_args=(thr_arr,),
                                   extra_specs=(smem_spec,))
        pieces.append(y2d.reshape(-1))
    if n_aligned != n:
        # <128-element tail: plain jnp, no pad/slice HBM round trips.
        pieces.append(jnp_fn(flat[n_aligned:]))

    out = pieces[0] if len(pieces) == 1 else jnp.concatenate(pieces)
    return out.reshape(x.shape)


class StraightThroughEstimator:
    """JAX/Pallas analogue of the PyTorch module (forward only)."""
    # TODO(synk): backward (identity / STE gradient) not implemented; forward only.

    def __init__(self, task: str, threshold: float | None = None,
                 mask_dtype=jnp.int8, use_pallas: bool = True):
        if task not in ("clean", "threshold"):
            raise ValueError(f"Unknown task {task}")
        self.task = task
        self.threshold = threshold if task == "threshold" else None
        self.mask_dtype = mask_dtype
        self.use_pallas = use_pallas

    def __call__(self, x):
        return ste_forward(x, self.task, self.threshold,
                           mask_dtype=self.mask_dtype,
                           use_pallas=self.use_pallas)


# ---------------------------------------------------------------------------
# Demo / self-test
# ---------------------------------------------------------------------------
if __name__ == "__main__":
    key = jax.random.PRNGKey(0)
    # NCHW input, as the surrounding iToF network would produce.
    x = jax.random.normal(key, (2, 4, 16, 16), dtype=jnp.float32) * 0.1

    # --- clean task ---
    clean_mod = StraightThroughEstimator(task="clean")
    y_clean = jax.block_until_ready(clean_mod(x))
    ref_clean = jnp.where(jnp.abs(x) < 0.05, 0.0, x)
    assert y_clean.shape == x.shape and y_clean.dtype == x.dtype
    assert jnp.array_equal(y_clean, ref_clean)

    # --- threshold task (int8 mask by default; configurable) ---
    thr = 0.02
    thr_mod = StraightThroughEstimator(task="threshold", threshold=thr)
    y_thr = jax.block_until_ready(thr_mod(x))
    ref_thr = jnp.where(x <= thr, 0, 1).astype(jnp.int8)
    assert y_thr.shape == x.shape and y_thr.dtype == jnp.int8
    assert jnp.array_equal(y_thr, ref_thr)

    # --- NaN parity with torch semantics ---
    x_nan = x.at[0, 0, 0, 0].set(jnp.nan)
    y_nan_clean = jax.block_until_ready(clean_mod(x_nan))
    assert jnp.isnan(y_nan_clean[0, 0, 0, 0])                      # NaN propagates
    y_nan_thr = jax.block_until_ready(thr_mod(x_nan))
    assert int(y_nan_thr[0, 0, 0, 0]) == 1                         # NaN -> 1

    # --- non-lane-aligned shape: exercises the prefix-kernel + jnp-tail path ---
    x2 = jax.random.normal(jax.random.PRNGKey(1), (2, 4, 17, 19),
                           dtype=jnp.float32) * 0.1
    y2 = jax.block_until_ready(clean_mod(x2))
    assert jnp.array_equal(y2, jnp.where(jnp.abs(x2) < 0.05, 0.0, x2))

    # --- larger input: exercises multi-block grid with a ragged last block ---
    x3 = jax.random.normal(jax.random.PRNGKey(2), (2, 8, 160, 160),
                           dtype=jnp.float32) * 0.1
    y3 = jax.block_until_ready(thr_mod(x3))
    assert jnp.array_equal(y3, jnp.where(x3 <= thr, 0, 1).astype(jnp.int8))

    # --- fusion-friendly non-Pallas fast path ---
    clean_fused = StraightThroughEstimator(task="clean", use_pallas=False)
    y_fused = jax.block_until_ready(clean_fused(x))
    assert jnp.array_equal(y_fused, ref_clean)

    print("KERNEL_OK")
</pallas_src>

<mosaic_0001>
module attributes {stable_mosaic.version = 11 : i64} {
  func.func @_clean_kernel(%arg0: i32, %arg1: memref<16x128xf32, #tpu.memory_space<vmem>>, %arg2: memref<16x128xf32, #tpu.memory_space<vmem>>) attributes {dimension_semantics = [#tpu.dimension_semantics<parallel>], iteration_bounds = array<i64: 1>, scalar_prefetch = 0 : i64, scratch_operands = 0 : i64, tpu.core_type = #tpu.core_type<tc>, window_params = [{transform_indices = @transform_0, window_bounds = array<i64: 16, 128>}, {transform_indices = @transform_1, window_bounds = array<i64: 16, 128>}]} {
    %c0 = arith.constant 0 : index
    %c0_0 = arith.constant 0 : index
    %0 = vector.load %arg1[%c0, %c0_0] : memref<16x128xf32, #tpu.memory_space<vmem>>, vector<16x128xf32>
    %1 = math.absf %0 : vector<16x128xf32>
    %cst = arith.constant 5.000000e-02 : f32
    %2 = vector.broadcast %cst : f32 to vector<16x128xf32>
    %3 = arith.cmpf olt, %1, %2 : vector<16x128xf32>
    %cst_1 = arith.constant 0.000000e+00 : f32
    %4 = vector.broadcast %cst_1 : f32 to vector<16x128xf32>
    %5 = arith.select %3, %4, %0 : vector<16x128xi1>, vector<16x128xf32>
    %c0_2 = arith.constant 0 : index
    %c0_3 = arith.constant 0 : index
    %6 = vector.load %arg2[%c0_2, %c0_3] : memref<16x128xf32, #tpu.memory_space<vmem>>, vector<16x128xf32>
    tpu.vector_store %arg2[%c0_2, %c0_3], %5 {strides = array<i32>} : memref<16x128xf32, #tpu.memory_space<vmem>>, vector<16x128xf32>,
    return
  }
  func.func @transform_0(%arg0: i32) -> (i32, i32) {
    %c0_i32 = arith.constant 0 : i32
    %c0_i32_0 = arith.constant 0 : i32
    return %arg0, %c0_i32 : i32, i32
  }
  func.func @transform_1(%arg0: i32) -> (i32, i32) {
    %c0_i32 = arith.constant 0 : i32
    %c0_i32_0 = arith.constant 0 : i32
    return %arg0, %c0_i32 : i32, i32
  }
}

</mosaic_0001>

<llo_original>
// kernel: ste_forward.1
$region0: #{ste_forward.1}
  #allocation0 [shape = 'u32[]', space=smem, size = 0x4, offset = 0x4, fixed_abs, tag = 'smem constant byte address 0x4 - core index']
  #allocation1 [shape = 'u32[144,128]{1,0:T(1,128)}', space=vmem, size = 0x12000, scoped, tag = 'internal scratch']
  %s0 = inlined_call_operand.vmem [shape: f32[16,128], index: 0, kind: input, shape index: {}]
  %s1 = inlined_call_operand.vmem [shape: f32[16,128], index: 1, kind: output, shape index: {}]
  %s2 = sld [smem:[#allocation0]]
  $region14: #{ste_forward.1} parent=0
    _
  %s4 = ssub.s32 1, %s2
  %s5 = scalar_select 0, %s4, %s2
  // Predicated region
  $region2: #{ste_forward.1} parent=0 // pred_check
    _
  $region3: #{ste_forward.1} parent=0 // pred_check_branch
    %7 = sbr.rel (0) target = $region5
  $region4: #{ste_forward.1} parent=0 // pred_region
    _
  $region5: #{ste_forward.1} parent=0 // pred_fallthru
    _
  %v8 = vld [vmem:[%s0] sm:$0xff]
  %v9 = vld [vmem:[%s0 + $0x8] sm:$0xff]
  %v10 = vand.u32 2147483647, %v8
  %v11 = vand.u32 2147483647, %v9
  %vm12 = vcmp.lt.f32.partialorder %v10, 0.05
  %vm13 = vcmp.lt.f32.partialorder %v11, 0.05
  %v14 = vsel %vm12, 0.0, %v8
  %v15 = vsel %vm13, 0.0, %v9
  %16 = vst [vmem:[%s1] sm:$0xff] %v14
  %17 = vst [vmem:[%s1 + $0x8] sm:$0xff] %v15
  // Predicated region
  $region6: #{ste_forward.1} parent=0 // pred_check
    _
  $region7: #{ste_forward.1} parent=0 // pred_check_branch
    %19 = sbr.rel (0) target = $region9
  $region8: #{ste_forward.1} parent=0 // pred_region
    _
  $region9: #{ste_forward.1} parent=0 // pred_fallthru
    _
  // Predicated region
  $region10: #{ste_forward.1} parent=0 // pred_check
    _
  $region11: #{ste_forward.1} parent=0 // pred_check_branch
    %21 = sbr.rel (0) target = $region13
  $region12: #{ste_forward.1} parent=0 // pred_region
    _
  $region13: #{ste_forward.1} parent=0 // pred_fallthru
    _

</llo_original>
